<compile_context>
chip_gen: v6e
topology: v6e:2x2x1
jax: 0.10.0
libtpu: 0.0.40
codegen_flags: <defaults>
</compile_context>

<pallas_src>
import functools
import math

import jax
import jax.numpy as jnp
from jax.experimental import pallas as pl
from jax.experimental.pallas import tpu as pltpu


def _wls_kernel(logits_ref, tgt_ref, lw_ref, loss_ref, *,
                gamma, ent, smooth, confidence):
    x = logits_ref[...].astype(jnp.float32)            # (TM, V)
    tm, V = x.shape

    tgt = tgt_ref[...]                                  # (TM, 1) int32
    valid = tgt >= 0
    tclamp = jnp.maximum(tgt, 0)

    # ---- row-wise softmax statistics (no full logP materialization) ----
    m = jnp.max(x, axis=-1, keepdims=True)              # (TM, 1)
    sum_x = jnp.sum(x, axis=-1, keepdims=True)          # (TM, 1)
    col = jax.lax.broadcasted_iota(jnp.int32, (tm, V), 1)
    # gather logit at target via compare+select reduction (one (TM,V) pass)
    x_t = jnp.sum(jnp.where(col == tclamp, x, 0.0), axis=-1, keepdims=True)
    logden = jnp.log(jnp.sum(jnp.exp(x - m), axis=-1, keepdims=True))

    logP_t = (x_t - m) - logden                          # logP at target
    sum_logP = (sum_x - V * m) - V * logden              # sum_v logP

    # KLDiv(logP, true_dist).sum(-1) = ent - sum_v td*logP
    cross = smooth * sum_logP + (confidence - smooth) * logP_t
    loss = ent - cross                                   # (TM, 1)

    # focal-style gamma weight (gamma_type='word'); only applied if gamma > 0
    if gamma > 0.0:
        p_t = jnp.clip(jnp.exp(logP_t), 0.0, 1.0)        # clamp: exp can exceed 1 by an ulp
        loss = loss * (1.0 - p_t) ** gamma

    # clip-score derived per-row loss weight
    loss = loss * lw_ref[...].astype(jnp.float32)

    loss_ref[...] = jnp.where(valid, loss, 0.0)


def weighted_label_smoothing_loss(
    logits,        # (bs, seq_len, V) float (f32 or bf16 — passed through untouched)
    targets,       # (bs, seq_len) int, -1 marks padding
    clip_score,    # (bs,) float
    *,
    label_smoothing=0.1,
    alpha=1.0,
    gamma=2.0,
    w=2.5,
    gamma_type="word",
    row_tile=512,
):
    if gamma_type != "word":
        # TODO(synk): gamma_type='batch' / 'sent' build (N,N) pair masks — not implemented here.
        raise NotImplementedError("only gamma_type='word' is implemented")

    bs, seq_len, V = logits.shape
    N = bs * seq_len

    # ---- glue: top-level forward() weight prep + flattening ----
    lw = jnp.clip(clip_score.astype(jnp.float32) / w * alpha, 0.0, 1.0)    # (bs,)
    lw2d = jnp.broadcast_to(lw[:, None], (bs, seq_len)).reshape(N, 1)
    logits2d = logits.reshape(N, V)                      # keep native dtype (bf16 ok)
    tgt2d = targets.reshape(N, 1).astype(jnp.int32)

    # ---- pick the largest row tile that fits the VMEM budget ----
    try:
        vmem_cap = int(pltpu.get_tpu_info().vmem_capacity_bytes)
    except Exception:
        vmem_cap = 64 * 1024 * 1024                      # conservative (v7x physical)
    vmem_limit = int(min(vmem_cap, 128 * 1024 * 1024))
    budget = int(vmem_limit * 0.55)                      # headroom for temps / pipeline

    itemsize = jnp.dtype(logits2d.dtype).itemsize
    # 2x double-buffered logits block + ~4 f32 (TM,V) temps + small column blocks
    bytes_per_row = V * (2 * itemsize + 4 * 4) + 6 * 128 * 4
    max_rows_budget = max(8, (budget // bytes_per_row) // 8 * 8)
    rows_needed = ((N + 7) // 8) * 8
    row_tile = int(max(8, (min(row_tile, max_rows_budget, rows_needed) // 8) * 8))

    grid_len = -(-N // row_tile)                         # cdiv
    n_pad = grid_len * row_tile
    if n_pad != N:                                       # ragged batch*seq: pad & mask
        pad = n_pad - N
        logits2d = jnp.pad(logits2d, ((0, pad), (0, 0)))
        tgt2d = jnp.pad(tgt2d, ((0, pad), (0, 0)), constant_values=-1)
        lw2d = jnp.pad(lw2d, ((0, pad), (0, 0)))

    # ---- smoothed-distribution constants (compile-time, 0*log0 guarded) ----
    smooth = label_smoothing / (V - 1)
    confidence = 1.0 - label_smoothing
    ent = 0.0
    if smooth > 0.0:
        ent += (V - 1) * smooth * math.log(smooth)
    if confidence > 0.0:
        ent += confidence * math.log(confidence)

    kernel = functools.partial(
        _wls_kernel,
        gamma=float(gamma), ent=float(ent),
        smooth=float(smooth), confidence=float(confidence),
    )

    per_row = pl.pallas_call(
        kernel,
        out_shape=jax.ShapeDtypeStruct((n_pad, 1), jnp.float32),
        grid_spec=pltpu.PrefetchScalarGridSpec(
            num_scalar_prefetch=0,
            grid=(grid_len,),
            in_specs=[
                pl.BlockSpec((row_tile, V), lambda i: (i, 0)),
                pl.BlockSpec((row_tile, 1), lambda i: (i, 0)),
                pl.BlockSpec((row_tile, 1), lambda i: (i, 0)),
            ],
            out_specs=pl.BlockSpec((row_tile, 1), lambda i: (i, 0)),
        ),
        compiler_params=pltpu.CompilerParams(
            dimension_semantics=("parallel",),
            vmem_limit_bytes=vmem_limit,
        ),
    )(logits2d, tgt2d, lw2d)

    # ---- glue: masked mean over valid tokens (tiny: n_pad floats) ----
    mask = (tgt2d >= 0).astype(jnp.float32)
    return jnp.sum(per_row) / jnp.maximum(jnp.sum(mask), 1.0)


def _reference(logits, targets, clip_score, *, label_smoothing, alpha, gamma, w):
    bs, seq_len, V = logits.shape
    N = bs * seq_len
    lw = jnp.clip(clip_score / w * alpha, 0.0, 1.0)
    lw = jnp.broadcast_to(lw[:, None], (bs, seq_len)).reshape(-1)
    logits2d = logits.reshape(N, V).astype(jnp.float32)
    tgt = targets.reshape(-1)
    mask = tgt >= 0
    assign = jnp.maximum(tgt, 0)
    logP = jax.nn.log_softmax(logits2d, axis=-1)
    probs = jax.nn.softmax(logits2d, axis=-1)
    sel = jnp.take_along_axis(probs, assign[:, None], axis=1)[:, 0]
    gamma_w = (1.0 - sel) ** gamma
    s = label_smoothing / (V - 1)
    c = 1.0 - label_smoothing
    true_dist = jnp.full((N, V), s, jnp.float32)
    true_dist = true_dist.at[jnp.arange(N), assign].set(c)
    kl = true_dist * (jnp.log(true_dist) - logP)
    loss = kl.sum(1) * lw * gamma_w
    return jnp.sum(jnp.where(mask, loss, 0.0)) / jnp.sum(mask)


if __name__ == "__main__":
    key = jax.random.PRNGKey(0)
    bs, seq_len, vocab = 2, 9, 128        # N=18: exercises the ragged-N padding path

    k1, k2, k3 = jax.random.split(key, 3)
    logits = jax.random.normal(k1, (bs, seq_len, vocab), dtype=jnp.float32)
    targets = jax.random.randint(k2, (bs, seq_len), 0, vocab, dtype=jnp.int32)
    # mark some padding positions (-1) to exercise the mask
    targets = targets.at[0, 7:].set(-1)
    targets = targets.at[1, 5:].set(-1)
    clip_score = jax.random.uniform(k3, (bs,), minval=0.0, maxval=3.0)

    cfg = dict(label_smoothing=0.1, alpha=1.0, gamma=2.0, w=2.5)

    out = weighted_label_smoothing_loss(logits, targets, clip_score, **cfg)
    out = jax.block_until_ready(out)

    ref = _reference(logits, targets, clip_score, **cfg)
    assert jnp.allclose(out, ref, rtol=1e-4, atol=1e-5), (out, ref)

    print("KERNEL_OK")
</pallas_src>

<mosaic_0001>
module attributes {stable_mosaic.version = 11 : i64} {
  func.func @_wls_kernel(%arg0: i32, %arg1: memref<24x128xf32, #tpu.memory_space<vmem>>, %arg2: memref<24x1xi32, #tpu.memory_space<vmem>>, %arg3: memref<24x1xf32, #tpu.memory_space<vmem>>, %arg4: memref<24x1xf32, #tpu.memory_space<vmem>>) attributes {dimension_semantics = [#tpu.dimension_semantics<parallel>], iteration_bounds = array<i64: 1>, scalar_prefetch = 0 : i64, scratch_operands = 0 : i64, tpu.core_type = #tpu.core_type<tc>, window_params = [{transform_indices = @transform_0, window_bounds = array<i64: 24, 128>}, {transform_indices = @transform_1, window_bounds = array<i64: 24, 1>}, {transform_indices = @transform_2, window_bounds = array<i64: 24, 1>}, {transform_indices = @transform_3, window_bounds = array<i64: 24, 1>}]} {
    %c0 = arith.constant 0 : index
    %c0_0 = arith.constant 0 : index
    %0 = vector.load %arg1[%c0, %c0_0] : memref<24x128xf32, #tpu.memory_space<vmem>>, vector<24x128xf32>
    %c0_1 = arith.constant 0 : index
    %c0_2 = arith.constant 0 : index
    %1 = vector.load %arg2[%c0_1, %c0_2] : memref<24x1xi32, #tpu.memory_space<vmem>>, vector<24x1xi32>
    %c0_i32 = arith.constant 0 : i32
    %2 = vector.broadcast %c0_i32 : i32 to vector<24x1xi32>
    %3 = arith.cmpi sge, %1, %2 : vector<24x1xi32>
    %c0_i32_3 = arith.constant 0 : i32
    %4 = vector.broadcast %c0_i32_3 : i32 to vector<24x1xi32>
    %5 = arith.maxsi %1, %4 : vector<24x1xi32>
    %cst = arith.constant dense<0xFF800000> : vector<24xf32>
    %6 = vector.multi_reduction <maximumf>, %0, %cst [1] : vector<24x128xf32> to vector<24xf32>
    %7 = vector.shape_cast %6 : vector<24xf32> to vector<24x1xf32>
    %cst_4 = arith.constant dense<0.000000e+00> : vector<24xf32>
    %8 = vector.multi_reduction <add>, %0, %cst_4 [1] : vector<24x128xf32> to vector<24xf32>
    %9 = vector.shape_cast %8 : vector<24xf32> to vector<24x1xf32>
    %10 = tpu.iota {dimensions = array<i32: 1>} : vector<24x128xi32>
    %11 = vector.broadcast %5 : vector<24x1xi32> to vector<24x128xi32>
    %12 = arith.cmpi eq, %10, %11 : vector<24x128xi32>
    %cst_5 = arith.constant 0.000000e+00 : f32
    %13 = vector.broadcast %cst_5 : f32 to vector<24x128xf32>
    %14 = arith.select %12, %0, %13 : vector<24x128xi1>, vector<24x128xf32>
    %cst_6 = arith.constant dense<0.000000e+00> : vector<24xf32>
    %15 = vector.multi_reduction <add>, %14, %cst_6 [1] : vector<24x128xf32> to vector<24xf32>
    %16 = vector.shape_cast %15 : vector<24xf32> to vector<24x1xf32>
    %17 = vector.broadcast %7 : vector<24x1xf32> to vector<24x128xf32>
    %18 = arith.subf %0, %17 : vector<24x128xf32>
    %19 = math.exp %18 : vector<24x128xf32>
    %cst_7 = arith.constant dense<0.000000e+00> : vector<24xf32>
    %20 = vector.multi_reduction <add>, %19, %cst_7 [1] : vector<24x128xf32> to vector<24xf32>
    %21 = vector.shape_cast %20 : vector<24xf32> to vector<24x1xf32>
    %22 = math.log %21 : vector<24x1xf32>
    %23 = arith.subf %16, %7 : vector<24x1xf32>
    %24 = arith.subf %23, %22 : vector<24x1xf32>
    %cst_8 = arith.constant 1.280000e+02 : f32
    %25 = vector.broadcast %cst_8 : f32 to vector<24x1xf32>
    %26 = arith.mulf %25, %7 : vector<24x1xf32>
    %27 = arith.subf %9, %26 : vector<24x1xf32>
    %cst_9 = arith.constant 1.280000e+02 : f32
    %28 = vector.broadcast %cst_9 : f32 to vector<24x1xf32>
    %29 = arith.mulf %28, %22 : vector<24x1xf32>
    %30 = arith.subf %27, %29 : vector<24x1xf32>
    %cst_10 = arith.constant 7.87401571E-4 : f32
    %31 = vector.broadcast %cst_10 : f32 to vector<24x1xf32>
    %32 = arith.mulf %31, %30 : vector<24x1xf32>
    %cst_11 = arith.constant 0.899212599 : f32
    %33 = vector.broadcast %cst_11 : f32 to vector<24x1xf32>
    %34 = arith.mulf %33, %24 : vector<24x1xf32>
    %35 = arith.addf %32, %34 : vector<24x1xf32>
    %cst_12 = arith.constant -0.809501707 : f32
    %36 = vector.broadcast %cst_12 : f32 to vector<24x1xf32>
    %37 = arith.subf %36, %35 : vector<24x1xf32>
    %38 = math.exp %24 : vector<24x1xf32>
    %cst_13 = arith.constant 0.000000e+00 : f32
    %cst_14 = arith.constant 1.000000e+00 : f32
    %39 = vector.broadcast %cst_13 : f32 to vector<24x1xf32>
    %40 = arith.maximumf %39, %38 : vector<24x1xf32>
    %41 = vector.broadcast %cst_14 : f32 to vector<24x1xf32>
    %42 = arith.minimumf %41, %40 : vector<24x1xf32>
    %cst_15 = arith.constant 1.000000e+00 : f32
    %43 = vector.broadcast %cst_15 : f32 to vector<24x1xf32>
    %44 = arith.subf %43, %42 : vector<24x1xf32>
    %cst_16 = arith.constant 2.000000e+00 : f32
    %45 = vector.broadcast %cst_16 : f32 to vector<24x1xf32>
    %46 = math.powf %44, %45 : vector<24x1xf32>
    %47 = arith.mulf %37, %46 : vector<24x1xf32>
    %c0_17 = arith.constant 0 : index
    %c0_18 = arith.constant 0 : index
    %48 = vector.load %arg3[%c0_17, %c0_18] : memref<24x1xf32, #tpu.memory_space<vmem>>, vector<24x1xf32>
    %49 = arith.mulf %47, %48 : vector<24x1xf32>
    %cst_19 = arith.constant 0.000000e+00 : f32
    %50 = vector.broadcast %cst_19 : f32 to vector<24x1xf32>
    %51 = arith.select %3, %49, %50 : vector<24x1xi1>, vector<24x1xf32>
    %c0_20 = arith.constant 0 : index
    %c0_21 = arith.constant 0 : index
    %52 = vector.load %arg4[%c0_20, %c0_21] : memref<24x1xf32, #tpu.memory_space<vmem>>, vector<24x1xf32>
    tpu.vector_store %arg4[%c0_20, %c0_21], %51 {strides = array<i32>} : memref<24x1xf32, #tpu.memory_space<vmem>>, vector<24x1xf32>,
    return
  }
  func.func @transform_0(%arg0: i32) -> (i32, i32) {
    %c0_i32 = arith.constant 0 : i32
    %c0_i32_0 = arith.constant 0 : i32
    return %arg0, %c0_i32 : i32, i32
  }
  func.func @transform_1(%arg0: i32) -> (i32, i32) {
    %c0_i32 = arith.constant 0 : i32
    %c0_i32_0 = arith.constant 0 : i32
    return %arg0, %c0_i32 : i32, i32
  }
  func.func @transform_2(%arg0: i32) -> (i32, i32) {
    %c0_i32 = arith.constant 0 : i32
    %c0_i32_0 = arith.constant 0 : i32
    return %arg0, %c0_i32 : i32, i32
  }
  func.func @transform_3(%arg0: i32) -> (i32, i32) {
    %c0_i32 = arith.constant 0 : i32
    %c0_i32_0 = arith.constant 0 : i32
    return %arg0, %c0_i32 : i32, i32
  }
}

</mosaic_0001>

<llo_original>
// kernel: tpu_custom_call.1
$region0: #{tpu_custom_call.1}
  #allocation0 [shape = 'u32[]', space=smem, size = 0x4, offset = 0x4, fixed_abs, tag = 'smem constant byte address 0x4 - core index']
  #allocation1 [shape = 'u32[144,128]{1,0:T(1,128)}', space=vmem, size = 0x12000, scoped, tag = 'internal scratch']
  %s0 = inlined_call_operand.vmem [shape: f32[24,128], index: 0, kind: input, shape index: {}]
  %s1 = inlined_call_operand.vmem [shape: s32[24,1], index: 1, kind: input, shape index: {}]
  %s2 = inlined_call_operand.vmem [shape: f32[24,1], index: 2, kind: input, shape index: {}]
  %s3 = inlined_call_operand.vmem [shape: f32[24,1], index: 3, kind: output, shape index: {}]
  %s4 = sld [smem:[#allocation0]]
  $region22: #{tpu_custom_call.1} parent=0
    _
  %s6 = ssub.s32 1, %s4
  %s7 = scalar_select 0, %s6, %s4
  // Predicated region
  $region2: #{tpu_custom_call.1} parent=0 // pred_check
    _
  $region3: #{tpu_custom_call.1} parent=0 // pred_check_branch
    %9 = sbr.rel (0) target = $region5
  $region4: #{tpu_custom_call.1} parent=0 // pred_region
    _
  $region5: #{tpu_custom_call.1} parent=0 // pred_fallthru
    _
  // Predicated region
  $region6: #{tpu_custom_call.1} parent=0 // pred_check
    _
  $region7: #{tpu_custom_call.1} parent=0 // pred_check_branch
    %11 = sbr.rel (0) target = $region9
  $region8: #{tpu_custom_call.1} parent=0 // pred_region
    _
  $region9: #{tpu_custom_call.1} parent=0 // pred_fallthru
    _
  // Predicated region
  $region10: #{tpu_custom_call.1} parent=0 // pred_check
    _
  $region11: #{tpu_custom_call.1} parent=0 // pred_check_branch
    %13 = sbr.rel (0) target = $region13
  $region12: #{tpu_custom_call.1} parent=0 // pred_region
    _
  $region13: #{tpu_custom_call.1} parent=0 // pred_fallthru
    _
  %v14 = vld [vmem:[%s0] sm:$0xff]
  %v15 = vld [vmem:[%s0 + $0x8] sm:$0xff]
  %v16 = vld [vmem:[%s0 + $0x10] sm:$0xff]
  %v17 = vld [vmem:[%s1] sm:$0xff]
  %v18 = vld [vmem:[%s1 + $0x8] sm:$0xff]
  %v19 = vld [vmem:[%s1 + $0x10] sm:$0xff]
  %vm20 = vcmp.ge.s32.totalorder %v17, 0
  %vm21 = vcmp.ge.s32.totalorder %v18, 0
  %vm22 = vcmp.ge.s32.totalorder %v19, 0
  %vm23 = vcmp.gt.s32.totalorder %v17, 0
  %v24 = vsel %vm23, %v17, 0
  %vm25 = vcmp.gt.s32.totalorder %v18, 0
  %v26 = vsel %vm25, %v18, 0
  %vm27 = vcmp.gt.s32.totalorder %v19, 0
  %v28 = vsel %vm27, %v19, 0
  %29 = vmax.xlane.f32.xlu0 %v14
  %v30 = vpop.xlane.xlu0 %29
  %31 = vmax.xlane.f32.xlu0 %v15
  %v32 = vpop.xlane.xlu0 %31
  %33 = vmax.xlane.f32.xlu0 %v16
  %v34 = vpop.xlane.xlu0 %33
  %35 = vadd.xlane.f32.xlu0 %v14
  %v36 = vpop.xlane.xlu0 %35
  %37 = vadd.xlane.f32.xlu0 %v15
  %v38 = vpop.xlane.xlu0 %37
  %39 = vadd.xlane.f32.xlu0 %v16
  %v40 = vpop.xlane.xlu0 %39
  %v41 = vlaneseq
  %v42 = vand.u32 %v41, 127
  %43 = vset.pattern.permute.xlu0 0
  %44 = vperm.xlu0 %43, %v24
  %v45 = vpop.permute.xlu0 %44
  %46 = vset.pattern.permute.xlu0 0
  %47 = vperm.xlu0 %46, %v26
  %v48 = vpop.permute.xlu0 %47
  %49 = vset.pattern.permute.xlu0 0
  %50 = vperm.xlu0 %49, %v28
  %v51 = vpop.permute.xlu0 %50
  %vm52 = vcmp.eq.s32.totalorder %v42, %v45
  %vm53 = vcmp.eq.s32.totalorder %v42, %v48
  %vm54 = vcmp.eq.s32.totalorder %v42, %v51
  %v55 = vsel %vm52, %v14, 0.0
  %v56 = vsel %vm53, %v15, 0.0
  %v57 = vsel %vm54, %v16, 0.0
  %58 = vadd.xlane.f32.xlu0 %v55
  %v59 = vpop.xlane.xlu0 %58
  %60 = vadd.xlane.f32.xlu0 %v56
  %v61 = vpop.xlane.xlu0 %60
  %62 = vadd.xlane.f32.xlu0 %v57
  %v63 = vpop.xlane.xlu0 %62
  %v64 = vsub.f32 %v14, %v30
  %v65 = vsub.f32 %v15, %v32
  %v66 = vsub.f32 %v16, %v34
  %v67 = vmul.f32 %v64, 1.442695
  %v68 = vpow.pop %v67
  %v69 = vmul.f32 %v65, 1.442695
  %v70 = vpow.pop %v69
  %v71 = vmul.f32 %v66, 1.442695
  %v72 = vpow.pop %v71
  %73 = vadd.xlane.f32.xlu0 %v68
  %v74 = vpop.xlane.xlu0 %73
  %75 = vadd.xlane.f32.xlu0 %v70
  %v76 = vpop.xlane.xlu0 %75
  %77 = vadd.xlane.f32.xlu0 %v72
  %v78 = vpop.xlane.xlu0 %77
  %v79 = vlog2.pop %v74
  %v80 = vmul.f32 %v79, 0.6931472
  %v81 = vlog2.pop %v76
  %v82 = vmul.f32 %v81, 0.6931472
  %v83 = vlog2.pop %v78
  %v84 = vmul.f32 %v83, 0.6931472
  %v85 = vsub.f32 %v59, %v30
  %v86 = vsub.f32 %v61, %v32
  %v87 = vsub.f32 %v63, %v34
  %v88 = vsub.f32 %v85, %v80
  %v89 = vsub.f32 %v86, %v82
  %v90 = vsub.f32 %v87, %v84
  %v91 = vmul.f32 %v30, 128.0
  %v92 = vmul.f32 %v32, 128.0
  %v93 = vmul.f32 %v34, 128.0
  %v94 = vsub.f32 %v36, %v91
  %v95 = vsub.f32 %v38, %v92
  %v96 = vsub.f32 %v40, %v93
  %v97 = vmul.f32 %v80, 128.0
  %v98 = vmul.f32 %v82, 128.0
  %v99 = vmul.f32 %v84, 128.0
  %v100 = vsub.f32 %v94, %v97
  %v101 = vsub.f32 %v95, %v98
  %v102 = vsub.f32 %v96, %v99
  %v103 = vmul.f32 %v100, 0.0007874016
  %v104 = vmul.f32 %v101, 0.0007874016
  %v105 = vmul.f32 %v102, 0.0007874016
  %v106 = vmul.f32 %v88, 0.8992126
  %v107 = vmul.f32 %v89, 0.8992126
  %v108 = vmul.f32 %v90, 0.8992126
  %v109 = vadd.f32 %v103, %v106
  %v110 = vadd.f32 %v104, %v107
  %v111 = vadd.f32 %v105, %v108
  %v112 = vsub.f32 -0.8095017, %v109
  %v113 = vsub.f32 -0.8095017, %v110
  %v114 = vsub.f32 -0.8095017, %v111
  %v115 = vmul.f32 %v88, 1.442695
  %v116 = vpow.pop %v115
  %v117 = vmul.f32 %v89, 1.442695
  %v118 = vpow.pop %v117
  %v119 = vmul.f32 %v90, 1.442695
  %v120 = vpow.pop %v119
  %v121 = vmax.f32 %v116, 0.0
  %v122 = vmax.f32 %v118, 0.0
  %v123 = vmax.f32 %v120, 0.0
  %v124 = vmin.f32 %v121, 1.0
  %v125 = vmin.f32 %v122, 1.0
  %v126 = vmin.f32 %v123, 1.0
  %v127 = vsub.f32 1.0, %v124
  %v128 = vsub.f32 1.0, %v125
  %v129 = vsub.f32 1.0, %v126
  %v130 = vpow.f32 %v127, 2.0
  %v131 = vpow.f32 %v128, 2.0
  %v132 = vpow.f32 %v129, 2.0
  %v133 = vmul.f32 %v112, %v130
  %v134 = vmul.f32 %v113, %v131
  %v135 = vmul.f32 %v114, %v132
  %v136 = vld [vmem:[%s2] sm:$0xff]
  %v137 = vld [vmem:[%s2 + $0x8] sm:$0xff]
  %v138 = vld [vmem:[%s2 + $0x10] sm:$0xff]
  %v139 = vmul.f32 %v133, %v136
  %v140 = vmul.f32 %v134, %v137
  %v141 = vmul.f32 %v135, %v138
  %v142 = vsel %vm20, %v139, 0.0
  %v143 = vsel %vm21, %v140, 0.0
  %v144 = vsel %vm22, %v141, 0.0
  %vm145 = vcmask 7168
  %146 = vst.msk [vmem:[%s3] sm:$0xff] %vm145, %v142
  %147 = vst.msk [vmem:[%s3 + $0x8] sm:$0xff] %vm145, %v143
  %148 = vst.msk [vmem:[%s3 + $0x10] sm:$0xff] %vm145, %v144
  // Predicated region
  $region14: #{tpu_custom_call.1} parent=0 // pred_check
    _
  $region15: #{tpu_custom_call.1} parent=0 // pred_check_branch
    %150 = sbr.rel (0) target = $region17
  $region16: #{tpu_custom_call.1} parent=0 // pred_region
    _
  $region17: #{tpu_custom_call.1} parent=0 // pred_fallthru
    _
  // Predicated region
  $region18: #{tpu_custom_call.1} parent=0 // pred_check
    _
  $region19: #{tpu_custom_call.1} parent=0 // pred_check_branch
    %152 = sbr.rel (0) target = $region21
  $region20: #{tpu_custom_call.1} parent=0 // pred_region
    _
  $region21: #{tpu_custom_call.1} parent=0 // pred_fallthru
    _

</llo_original>
